<compile_context>
chip_gen: v7x
topology: tpu7x:2x2x1
jax: 0.10.0
libtpu: 0.0.40
codegen_flags: <defaults>
</compile_context>

<pallas_src>
import functools

import jax
import jax.numpy as jnp
from jax.experimental import pallas as pl
from jax.experimental.pallas import tpu as pltpu


def _round_up(x, m):
    return ((x + m - 1) // m) * m


def _contrastive_loss_kernel(o1_ref, o2_ref, t_ref, out_ref, *,
                             margin: float, eps: float,
                             batch: int, tile_rows: int, need_mask: bool):
    i = pl.program_id(0)

    # Upcast per tile; inputs stream at native dtype bandwidth. Keep all
    # arithmetic in f32 (required on v5e, harmless elsewhere).
    o1 = o1_ref[...].astype(jnp.float32)
    o2 = o2_ref[...].astype(jnp.float32)
    diff = o2 - o1
    distances = jnp.sum(diff * diff, axis=1, keepdims=True)      # (TB, 1)
    target = t_ref[...]                                          # (TB, 1) f32

    sqrt_d = jnp.sqrt(distances + eps)
    hinge = jnp.maximum(margin - sqrt_d, 0.0)                    # relu(margin - sqrt(d+eps))
    # 0.5 factor hoisted to the wrapper (power of two -> exact).
    losses = target * distances + (1.0 - target) * hinge * hinge

    # Lane-dense (1, 128) store: partial sum in lane 0, zeros elsewhere.
    lane = jax.lax.broadcasted_iota(jnp.int32, (1, 128), 1)
    out_ref[...] = jnp.where(lane == 0, jnp.sum(losses), 0.0)

    if need_mask:
        # Only the last tile can contain padded (out-of-range) rows; gate the
        # mask so every other tile stays on the HBM roofline.
        @pl.when(i == pl.num_programs(0) - 1)
        def _():
            row = (jax.lax.broadcasted_iota(jnp.int32, (tile_rows, 1), 0)
                   + i * tile_rows)
            masked = jnp.where(row < batch, losses, 0.0)
            out_ref[...] = jnp.where(lane == 0, jnp.sum(masked), 0.0)


def contrastive_loss(output1, output2, target, *, margin: float,
                     eps: float = 1e-9, size_average: bool = True,
                     tile_rows=None):
    """output1, output2: (B, D) float32/bfloat16; target: (B,) int or float."""
    B, D = output1.shape
    itemsize = jnp.dtype(output1.dtype).itemsize
    sub = {4: 8, 2: 16, 1: 32}.get(itemsize, 8)   # sublane packing multiple

    # --- Tile sizing (lane-padding aware) --------------------------------
    # VMEM tiles pad the last dim to 128 lanes, so footprint math must use
    # the padded width.  Per batch-row, per pipelined grid step we hold:
    #   2 inputs x 2 buffers x D_pad*itemsize  +  target: 2 buffers x 128*4 B
    D_pad = _round_up(D, 128)
    per_row_bytes = 4 * D_pad * itemsize + 2 * 128 * 4
    budget_bytes = 16 * 1024 * 1024               # double-buffered working set
    rows_budget = max(sub, (budget_bytes // per_row_bytes) // sub * sub)

    if tile_rows is not None:
        tb = int(tile_rows)
        tb = B if tb >= B else max(sub, (tb // sub) * sub)
    else:
        tb = rows_budget
        if tb >= B:
            # Whole batch fits in one tile.  If the batch is large enough to
            # matter, split into >= 2 tiles so v7x's two TensorCores each take
            # half and the DMA pipeline overlaps (neutral on v5e/v6e).
            if B >= 2 * sub and 2 * B * D * itemsize >= (1 << 20):
                tb = min(B, _round_up((B + 1) // 2, sub))
            else:
                tb = B

    num_tiles = pl.cdiv(B, tb)
    need_mask = (B % tb) != 0

    # Pre-cast target once (tiny, B*4 bytes) -> no per-tile int->f32 convert.
    t = target.reshape(B, 1).astype(jnp.float32)

    kernel = functools.partial(
        _contrastive_loss_kernel,
        margin=float(margin), eps=float(eps),
        batch=B, tile_rows=tb, need_mask=need_mask,
    )

    # Deeper pipelining only when the batch forces small tiles with many grid
    # steps (residual per-step DMA latency would otherwise stay exposed).
    in_tile_bytes = tb * D_pad * itemsize
    if num_tiles >= 4 and in_tile_bytes < (1 << 19):
        def big_in_spec():
            return pl.BlockSpec((tb, D), lambda i: (i, 0),
                                pipeline_mode=pl.Buffered(3))
    else:
        def big_in_spec():
            return pl.BlockSpec((tb, D), lambda i: (i, 0))

    grid_spec = pltpu.PrefetchScalarGridSpec(
        num_scalar_prefetch=0,
        grid=(num_tiles,),
        in_specs=[
            big_in_spec(),
            big_in_spec(),
            pl.BlockSpec((tb, 1), lambda i: (i, 0)),
        ],
        out_specs=pl.BlockSpec((1, 128), lambda i: (0, i)),
    )

    cost = pl.CostEstimate(
        flops=3 * B * D + 8 * B,
        transcendentals=B,
        bytes_accessed=2 * B * D * itemsize + B * 4 + num_tiles * 128 * 4,
    )

    partials = pl.pallas_call(
        kernel,
        out_shape=jax.ShapeDtypeStruct((1, 128 * num_tiles), jnp.float32),
        grid_spec=grid_spec,
        compiler_params=pltpu.CompilerParams(
            dimension_semantics=("parallel",),
            vmem_limit_bytes=32 * 1024 * 1024,
        ),
        cost_estimate=cost,
    )(output1, output2, t)

    total = 0.5 * jnp.sum(partials)   # negligible wrapper-side reduce + scale
    return total / B if size_average else total


def _reference(output1, output2, target, margin, eps=1e-9, size_average=True):
    o1 = output1.astype(jnp.float32)
    o2 = output2.astype(jnp.float32)
    distances = jnp.sum((o2 - o1) ** 2, axis=1)
    tgt = target.astype(jnp.float32)
    losses = 0.5 * (
        tgt * distances
        + (1.0 - tgt) * jnp.maximum(margin - jnp.sqrt(distances + eps), 0.0) ** 2
    )
    return jnp.mean(losses) if size_average else jnp.sum(losses)


if __name__ == "__main__":
    margin = 1.0
    key = jax.random.PRNGKey(0)
    k1, k2, k3, k4, k5, k6, k7, k8, k9 = jax.random.split(key, 9)

    # --- Test 1: small f32, single full-batch tile, mean and sum ----------
    B, D = 8, 32
    o1 = jax.random.normal(k1, (B, D), dtype=jnp.float32)
    o2 = jax.random.normal(k2, (B, D), dtype=jnp.float32)
    tgt = jax.random.bernoulli(k3, 0.5, (B,)).astype(jnp.int32)

    loss = contrastive_loss(o1, o2, tgt, margin=margin)
    jax.block_until_ready(loss)
    ref = _reference(o1, o2, tgt, margin)
    assert jnp.allclose(loss, ref, rtol=1e-5, atol=1e-6), (loss, ref)

    loss_sum = contrastive_loss(o1, o2, tgt, margin=margin, size_average=False)
    ref_sum = _reference(o1, o2, tgt, margin, size_average=False)
    assert jnp.allclose(loss_sum, ref_sum, rtol=1e-5, atol=1e-6), (loss_sum, ref_sum)

    # --- Test 2: bf16 inputs, multi-tile grid with a partial last tile ----
    B2, D2 = 20, 128
    o1b = jax.random.normal(k4, (B2, D2), dtype=jnp.float32).astype(jnp.bfloat16)
    o2b = jax.random.normal(k5, (B2, D2), dtype=jnp.float32).astype(jnp.bfloat16)
    tgt2 = jax.random.bernoulli(k6, 0.5, (B2,)).astype(jnp.int32)

    loss2 = contrastive_loss(o1b, o2b, tgt2, margin=margin, tile_rows=8)
    jax.block_until_ready(loss2)
    ref2 = _reference(o1b, o2b, tgt2, margin)
    assert jnp.allclose(loss2, ref2, rtol=1e-5, atol=1e-6), (loss2, ref2)

    # --- Test 3: many small tiles -> exercises Buffered(3) + last-tile mask
    B3, D3 = 60, 32
    o1c = jax.random.normal(k7, (B3, D3), dtype=jnp.float32)
    o2c = jax.random.normal(k8, (B3, D3), dtype=jnp.float32)
    tgt3 = jax.random.bernoulli(k9, 0.5, (B3,)).astype(jnp.int32)

    loss3 = contrastive_loss(o1c, o2c, tgt3, margin=margin, tile_rows=8)
    jax.block_until_ready(loss3)
    ref3 = _reference(o1c, o2c, tgt3, margin)
    assert jnp.allclose(loss3, ref3, rtol=1e-5, atol=1e-6), (loss3, ref3)

    print("KERNEL_OK")
</pallas_src>

<mosaic_0001>
module attributes {stable_mosaic.version = 11 : i64} {
  func.func @_contrastive_loss_kernel(%arg0: i32, %arg1: memref<8x32xf32, #tpu.memory_space<vmem>>, %arg2: memref<8x32xf32, #tpu.memory_space<vmem>>, %arg3: memref<8x1xf32, #tpu.memory_space<vmem>>, %arg4: memref<1x128xf32, #tpu.memory_space<vmem>>) attributes {dimension_semantics = [#tpu.dimension_semantics<parallel>], iteration_bounds = array<i64: 1>, scalar_prefetch = 0 : i64, scratch_operands = 0 : i64, tpu.core_type = #tpu.core_type<tc>, window_params = [{transform_indices = @transform_0, window_bounds = array<i64: 8, 32>}, {transform_indices = @transform_1, window_bounds = array<i64: 8, 32>}, {transform_indices = @transform_2, window_bounds = array<i64: 8, 1>}, {transform_indices = @transform_3, window_bounds = array<i64: 1, 128>}]} {
    %c0 = arith.constant 0 : index
    %c0_0 = arith.constant 0 : index
    %0 = vector.load %arg1[%c0, %c0_0] : memref<8x32xf32, #tpu.memory_space<vmem>>, vector<8x32xf32>
    %c0_1 = arith.constant 0 : index
    %c0_2 = arith.constant 0 : index
    %1 = vector.load %arg2[%c0_1, %c0_2] : memref<8x32xf32, #tpu.memory_space<vmem>>, vector<8x32xf32>
    %2 = arith.subf %1, %0 : vector<8x32xf32>
    %3 = arith.mulf %2, %2 : vector<8x32xf32>
    %cst = arith.constant dense<0.000000e+00> : vector<8xf32>
    %4 = vector.multi_reduction <add>, %3, %cst [1] : vector<8x32xf32> to vector<8xf32>
    %5 = vector.shape_cast %4 : vector<8xf32> to vector<8x1xf32>
    %c0_3 = arith.constant 0 : index
    %c0_4 = arith.constant 0 : index
    %6 = vector.load %arg3[%c0_3, %c0_4] : memref<8x1xf32, #tpu.memory_space<vmem>>, vector<8x1xf32>
    %cst_5 = arith.constant 9.99999971E-10 : f32
    %7 = vector.broadcast %cst_5 : f32 to vector<8x1xf32>
    %8 = arith.addf %5, %7 : vector<8x1xf32>
    %9 = math.sqrt %8 : vector<8x1xf32>
    %cst_6 = arith.constant 1.000000e+00 : f32
    %10 = vector.broadcast %cst_6 : f32 to vector<8x1xf32>
    %11 = arith.subf %10, %9 : vector<8x1xf32>
    %cst_7 = arith.constant 0.000000e+00 : f32
    %12 = vector.broadcast %cst_7 : f32 to vector<8x1xf32>
    %13 = arith.maximumf %11, %12 : vector<8x1xf32>
    %14 = arith.mulf %6, %5 : vector<8x1xf32>
    %cst_8 = arith.constant 1.000000e+00 : f32
    %15 = vector.broadcast %cst_8 : f32 to vector<8x1xf32>
    %16 = arith.subf %15, %6 : vector<8x1xf32>
    %17 = arith.mulf %16, %13 : vector<8x1xf32>
    %18 = arith.mulf %17, %13 : vector<8x1xf32>
    %19 = arith.addf %14, %18 : vector<8x1xf32>
    %20 = tpu.iota {dimensions = array<i32: 1>} : vector<1x128xi32>
    %c0_i32 = arith.constant 0 : i32
    %21 = vector.broadcast %c0_i32 : i32 to vector<1x128xi32>
    %22 = arith.cmpi eq, %20, %21 : vector<1x128xi32>
    %23 = vector.shape_cast %19 : vector<8x1xf32> to vector<1x8x1xf32>
    %cst_9 = arith.constant dense<0.000000e+00> : vector<1xf32>
    %24 = vector.multi_reduction <add>, %23, %cst_9 [1, 2] : vector<1x8x1xf32> to vector<1xf32>
    %25 = vector.shape_cast %24 : vector<1xf32> to vector<1x1x1xf32>
    %26 = vector.extract %25[0, 0, 0] : f32 from vector<1x1x1xf32>
    %cst_10 = arith.constant 0.000000e+00 : f32
    %27 = vector.broadcast %26 : f32 to vector<1x128xf32>
    %28 = vector.broadcast %cst_10 : f32 to vector<1x128xf32>
    %29 = arith.select %22, %27, %28 : vector<1x128xi1>, vector<1x128xf32>
    %c0_11 = arith.constant 0 : index
    %c0_12 = arith.constant 0 : index
    %30 = vector.load %arg4[%c0_11, %c0_12] : memref<1x128xf32, #tpu.memory_space<vmem>>, vector<1x128xf32>
    tpu.vector_store %arg4[%c0_11, %c0_12], %29 {strides = array<i32>} : memref<1x128xf32, #tpu.memory_space<vmem>>, vector<1x128xf32>,
    return
  }
  func.func @transform_0(%arg0: i32) -> (i32, i32) {
    %c0_i32 = arith.constant 0 : i32
    %c0_i32_0 = arith.constant 0 : i32
    return %arg0, %c0_i32 : i32, i32
  }
  func.func @transform_1(%arg0: i32) -> (i32, i32) {
    %c0_i32 = arith.constant 0 : i32
    %c0_i32_0 = arith.constant 0 : i32
    return %arg0, %c0_i32 : i32, i32
  }
  func.func @transform_2(%arg0: i32) -> (i32, i32) {
    %c0_i32 = arith.constant 0 : i32
    %c0_i32_0 = arith.constant 0 : i32
    return %arg0, %c0_i32 : i32, i32
  }
  func.func @transform_3(%arg0: i32) -> (i32, i32) {
    %c0_i32 = arith.constant 0 : i32
    %c0_i32_0 = arith.constant 0 : i32
    return %c0_i32, %arg0 : i32, i32
  }
}

</mosaic_0001>

<llo_original>
// kernel: tpu_custom_call.1
$region0: #{tpu_custom_call.1}
  #allocation0 [shape = 'u32[]', space=smem, size = 0x4, offset = 0x4, fixed_abs, tag = 'smem constant byte address 0x4 - core index']
  #allocation1 [shape = 'u32[144,128]{1,0:T(1,128)}', space=vmem, size = 0x12000, scoped, tag = 'internal scratch']
  %s0 = inlined_call_operand.vmem [shape: f32[8,32], index: 0, kind: input, shape index: {}]
  %s1 = inlined_call_operand.hbm [shape: f32[8,32], index: 1, kind: input, shape index: {}]
  %s2 = inlined_call_operand.vmem [shape: f32[8,1], index: 2, kind: input, shape index: {}]
  %s3 = inlined_call_operand.hbm [shape: f32[1,128], index: 3, kind: output, shape index: {}]
  %s4 = sld [smem:[#allocation0]]
  $region26: #{tpu_custom_call.1} parent=0
    _
  %s6 = ssub.s32 1, %s4
  %s7 = scalar_select 0, %s6, %s4
  $region1: #{tpu_custom_call.1} parent=0
    #allocation2 [shape = 'u8[4096]{0}', space=vmem, size = 0x1000, scoped, tag = 'input window, operand 1, single buffered']
    #allocation3 [shape = 's32[1]{0}', space=sflag, size = 0x4, scoped, tag = 'scoped memory for tpu_custom_call.1']
    #allocation4 [shape = 's32[1]{0}', space=sflag, size = 0x4, scoped, tag = 'scoped memory for tpu_custom_call.1']
    #allocation5 [shape = 'u8[512]{0}', space=vmem, size = 0x400, scoped, tag = 'output window, operand 0, single buffered']
    %8 = vsyncpa [#allocation3], 0
    %9 = vsyncpa [#allocation4], 0
    // Predicated region
    $region2: #{tpu_custom_call.1} parent=1 // pred_check
      _
    $region3: #{tpu_custom_call.1} parent=1 // pred_check_branch
      %11 = sbr.rel (0) target = $region5
    $region4: #{tpu_custom_call.1} parent=1 // pred_region
      _
    $region5: #{tpu_custom_call.1} parent=1 // pred_fallthru
      _
    // Predicated region
    $region6: #{tpu_custom_call.1} parent=1 // pred_check
      _
    $region7: #{tpu_custom_call.1} parent=1 // pred_check_branch
      %13 = sbr.rel (0) target = $region9
    $region8: #{tpu_custom_call.1} parent=1 // pred_region
      %s15 = ssub.s32 128, 128
      %16 = vsyncadd [#allocation3], %s15
      %s18 = sshll.u32 [#allocation2], 4
      %s19 = int_to_ptr.vmem [resolvable:$true] %s18
      %21 = dma.hbm_to_vmem [thread:$0]  %s1, 128, %s19, [#allocation3]
    $region9: #{tpu_custom_call.1} parent=1 // pred_fallthru
      _
    // Predicated region
    $region10: #{tpu_custom_call.1} parent=1 // pred_check
      _
    $region11: #{tpu_custom_call.1} parent=1 // pred_check_branch
      %23 = sbr.rel (0) target = $region13
    $region12: #{tpu_custom_call.1} parent=1 // pred_region
      _
    $region13: #{tpu_custom_call.1} parent=1 // pred_fallthru
      _
    // Predicated region
    $region14: #{tpu_custom_call.1} parent=1 // pred_check
      _
    $region15: #{tpu_custom_call.1} parent=1 // pred_check_branch
      %25 = sbr.rel (0) target = $region17
    $region16: #{tpu_custom_call.1} parent=1 // pred_region
      %26 = dma.done [#allocation3], 128
    $region17: #{tpu_custom_call.1} parent=1 // pred_fallthru
      _
    %v27 = vld [vmem:[%s0] sm:$0xff]
    %v28 = vld [vmem:[#allocation2] sm:$0xff]
    %v29 = vsub.f32 %v28, %v27
    %v30 = vmul.f32 %v29, %v29
    %vm31 = vcmask 261120
    %v32 = vsel %vm31, %v30, 0.0
    %33 = vadd.xlane.f32.xlu0 %v32
    %v34 = vpop.xlane.xlu0 %33
    %v35 = vld [vmem:[%s2] sm:$0xff]
    %v36 = vadd.f32 %v34, 1e-09
    %v37 = vrsqrt.pop %v36
    %v38 = vmul.f32 %v36, %v37
    %vm39 = vcmp.eq.f32.partialorder %v36, inf
    %v40 = vsel %vm39, %v36, %v38
    %vm41 = vcmp.eq.f32.partialorder %v36, 0.0
    %v42 = vand.u32 %v36, 2147483648
    %v43 = vsel %vm41, %v42, %v40
    %v44 = vsub.f32 1.0, %v43
    %v45 = vmax.f32 %v44, 0.0
    %v46 = vmul.f32 %v35, %v34
    %v47 = vsub.f32 1.0, %v35
    %v48 = vmul.f32 %v47, %v45
    %v49 = vmul.f32 %v48, %v45
    %v50 = vadd.f32 %v46, %v49
    %v51 = vlaneseq
    %v52 = vand.u32 %v51, 127
    %vm53 = vcmp.eq.s32.totalorder %v52, 0
    %vm54 = vcmask 7168
    %v55 = vsel %vm54, %v50, 0.0
    %56 = vadd.xlane.f32.xlu0 %v55
    %v57 = vpop.xlane.xlu0 %56
    %v58 = vrot.slane %v57, 4
    %v59 = vadd.f32 %v57, %v58
    %v60 = vrot.slane %v59, 2
    %v61 = vadd.f32 %v59, %v60
    %v62 = vrot.slane %v61, 1
    %v63 = vadd.f32 %v61, %v62
    %s64 = vtos %v63
    %v65 = vstv %s64
    %v66 = vsel %vm53, %v65, 0.0
    %67 = vst [vmem:[#allocation5] sm:$0x1] %v66
    // Predicated region
    $region18: #{tpu_custom_call.1} parent=1 // pred_check
      _
    $region19: #{tpu_custom_call.1} parent=1 // pred_check_branch
      %69 = sbr.rel (0) target = $region21
    $region20: #{tpu_custom_call.1} parent=1 // pred_region
      %s71 = ssub.s32 16, 16
      %72 = vsyncadd [#allocation4], %s71
      %s74 = sshll.u32 [#allocation5], 4
      %s75 = int_to_ptr.vmem [resolvable:$true] %s74
      %77 = dma.vmem_to_hbm [thread:$0]  %s75, 16, %s3, [#allocation4]
    $region21: #{tpu_custom_call.1} parent=1 // pred_fallthru
      _
    // Predicated region
    $region22: #{tpu_custom_call.1} parent=1 // pred_check
      _
    $region23: #{tpu_custom_call.1} parent=1 // pred_check_branch
      %79 = sbr.rel (0) target = $region25
    $region24: #{tpu_custom_call.1} parent=1 // pred_region
      %80 = dma.done [#allocation4], 16
    $region25: #{tpu_custom_call.1} parent=1 // pred_fallthru
      _
    %81 = vsyncpa [#allocation3], 1
    %82 = vsyncpa [#allocation4], 1

</llo_original>
